<compile_context>
chip_gen: v7x
topology: tpu7x:2x2x1
jax: 0.10.0
libtpu: 0.0.40
codegen_flags: <defaults>
</compile_context>

<pallas_src>
import functools

import jax
import jax.numpy as jnp
from jax.experimental import pallas as pl
from jax.experimental.pallas import tpu as pltpu

LANE = 512           # lane-dense last dim (multiple of 128 -> big unmasked vst)
SUBLANES = 8
BLOCK_ROWS = 1024    # 1024x512 tile: 2 MiB f32 in + 2 MiB u32 hash + 2 MiB f32 out
                     # + 0.5 MiB i8 out, x2 buffers ~= 13 MiB -> fits v5e's 16 MiB
                     # default scoped VMEM; plenty of headroom on v6e / v7x.
GOLDEN = 0x9E3779B1  # 32-bit golden-ratio multiplier


def _edge_drop_kernel(scalar_ref, hash0_ref, vals_ref, newvals_ref, mask_ref,
                      *, thresh24):
    """Per tile: counter-based hash -> 24 random bits, threshold, select."""
    block_rows, lane = vals_ref.shape
    block_elems = block_rows * lane

    seed = scalar_ref[0].astype(jnp.uint32)
    num_edges = scalar_ref[1]

    base = pl.program_id(0) * block_elems                   # int32 (< 2**31 by contract)
    base_g = base.astype(jnp.uint32) * jnp.uint32(GOLDEN)   # scalar, folded into hash

    # murmur3 fmix32 over (gidx * GOLDEN) ^ seed.  The grid-invariant per-element
    # term local_idx * GOLDEN lives in hash0_ref (DMA'd once per core thanks to
    # its constant index_map), so per step the VALU only does one broadcast add
    # + one xor before the fmix rounds.  Result is tiling-invariant.
    x = (hash0_ref[...] + base_g) ^ seed
    x = x ^ (x >> jnp.uint32(16))
    x = x * jnp.uint32(0x85EBCA6B)
    x = x ^ (x >> jnp.uint32(13))
    x = x * jnp.uint32(0xC2B2AE35)
    x = x ^ (x >> jnp.uint32(16))

    r24 = (x >> jnp.uint32(8)).astype(jnp.int32)            # 24 uniform bits
    keep_rand = r24 < thresh24

    # Only blocks that cross or lie beyond num_edges pay for the tail mask.
    needs_tail = (num_edges - base) < block_elems

    @pl.when(needs_tail)
    def _():
        r = jax.lax.broadcasted_iota(jnp.int32, (block_rows, lane), 0)
        c = jax.lax.broadcasted_iota(jnp.int32, (block_rows, lane), 1)
        keep = keep_rand & ((r * lane + c) < (num_edges - base))
        mask_ref[...] = keep.astype(jnp.int8)
        newvals_ref[...] = jnp.where(keep, vals_ref[...], 0.0).astype(newvals_ref.dtype)

    @pl.when(jnp.logical_not(needs_tail))
    def _():
        mask_ref[...] = keep_rand.astype(jnp.int8)
        newvals_ref[...] = jnp.where(keep_rand, vals_ref[...], 0.0).astype(newvals_ref.dtype)


def _pick_block_rows(rows):
    """Block height: cap at BLOCK_ROWS; split mid-size slabs into >= 2 balanced
    blocks so both v7x TensorCores get work (and DMA/compute can overlap)."""
    if rows >= 2 * BLOCK_ROWS:
        return BLOCK_ROWS
    if rows >= 2 * SUBLANES:
        half = -(-rows // 2)
        return -(-half // SUBLANES) * SUBLANES
    return rows          # tiny slab: single full-height block (no (8,128) issue)


def _seed32(seed):
    s = int(seed) & 0xFFFFFFFF          # only the low 32 bits of the seed are used
    return s - (1 << 32) if s >= (1 << 31) else s


@functools.partial(jax.jit, static_argnames=("keep_rate", "donate_vals"))
def _edge_drop_call(vals_2d, scalars, keep_rate, donate_vals=False):
    rows, lane = vals_2d.shape
    block_rows = _pick_block_rows(rows)
    num_blocks = pl.cdiv(rows, block_rows)

    thresh24 = int(round(float(keep_rate) * (1 << 24)))
    thresh24 = max(0, min(1 << 24, thresh24))
    kernel = functools.partial(_edge_drop_kernel, thresh24=thresh24)

    # Grid-invariant hash term local_idx * GOLDEN (<= 2 MiB).  Constant
    # index_map -> Pallas copies it into VMEM only once per core.
    hash0 = (jnp.arange(block_rows * lane, dtype=jnp.uint32)
             .reshape(block_rows, lane) * jnp.uint32(GOLDEN))

    return pl.pallas_call(
        kernel,
        out_shape=(
            jax.ShapeDtypeStruct((rows, lane), jnp.float32),
            jax.ShapeDtypeStruct((rows, lane), jnp.int8),
        ),
        grid_spec=pltpu.PrefetchScalarGridSpec(
            num_scalar_prefetch=1,                          # [seed, num_edges] -> SMEM
            grid=(num_blocks,),
            in_specs=[
                pl.BlockSpec((block_rows, lane), lambda i, s: (0, 0)),   # hash0 (const)
                pl.BlockSpec((block_rows, lane), lambda i, s: (i, 0)),   # vals
            ],
            out_specs=(
                pl.BlockSpec((block_rows, lane), lambda i, s: (i, 0)),   # new_vals
                pl.BlockSpec((block_rows, lane), lambda i, s: (i, 0)),   # mask
            ),
        ),
        # Aliases the vals slab onto new_vals for callers that donate it
        # (indices count the scalar-prefetch operand: 0=scalars, 1=hash0, 2=vals).
        input_output_aliases={2: 0} if donate_vals else {},
        compiler_params=pltpu.CompilerParams(
            dimension_semantics=("parallel",),              # shard rows across TCs (v7x)
        ),
    )(scalars, hash0, vals_2d)


def sp_adj_edge_drop_padded(vals_2d, num_edges, keep_rate, seed=0, donate_vals=False):
    """Hot path: edge values stay in the lane-major padded (rows, LANE) slab
    end-to-end (no wrapper pad/reshape/slice re-streaming HBM).  Every lane
    whose flat index is >= num_edges gets mask=0 / value=0 inside the kernel,
    regardless of how many padding rows/blocks the slab carries, so the padded
    outputs are safe to feed straight into the next call."""
    if keep_rate == 1.0:
        rows, lane = vals_2d.shape
        r = jax.lax.broadcasted_iota(jnp.int32, (rows, lane), 0)
        c = jax.lax.broadcasted_iota(jnp.int32, (rows, lane), 1)
        valid = (r * lane + c) < num_edges
        return jnp.where(valid, vals_2d, 0.0), valid.astype(jnp.int8)
    scalars = jnp.asarray([_seed32(seed), num_edges], dtype=jnp.int32)
    return _edge_drop_call(vals_2d, scalars,
                           keep_rate=float(keep_rate), donate_vals=donate_vals)


def sp_adj_edge_drop(idxs, vals, keep_rate, seed=0):
    """JAX/Pallas equivalent of SpAdjEdgeDrop.forward (1-D convenience API).

    idxs: (2, E) int32 COO indices, vals: (E,) float32 edge values.
    Returns (idxs, new_vals, keep_mask); dropped edges have new_vals == 0 and
    keep_mask == 0.  NOTE: this wrapper pays extra HBM copies for the pad/
    reshape before the kernel and the reshape/slice after it; for repeated
    large-E use, prefer sp_adj_edge_drop_padded and keep the 2-D slab layout
    across calls.
    """
    if keep_rate == 1.0:
        return idxs, vals, jnp.ones(vals.shape, dtype=jnp.int8)

    e = vals.shape[0]
    rows = -(-e // LANE)                       # no rounding to block multiples needed
    e_pad = rows * LANE
    vals_2d = jnp.pad(vals.astype(jnp.float32), (0, e_pad - e)).reshape(rows, LANE)
    new_vals_2d, mask_2d = sp_adj_edge_drop_padded(vals_2d, e, keep_rate, seed)
    new_vals = new_vals_2d.reshape(-1)[:e]
    mask = mask_2d.reshape(-1)[:e]
    return idxs, new_vals, mask


if __name__ == "__main__":
    key = jax.random.PRNGKey(0)
    k_val, k_row, k_col = jax.random.split(key, 3)

    num_nodes = 16
    num_edges = 1024  # E: number of nonzeros in the sparse adjacency

    rows_i = jax.random.randint(k_row, (num_edges,), 0, num_nodes, dtype=jnp.int32)
    cols_i = jax.random.randint(k_col, (num_edges,), 0, num_nodes, dtype=jnp.int32)
    idxs = jnp.stack([rows_i, cols_i], axis=0)                    # (2, E)
    vals = jax.random.uniform(k_val, (num_edges,), jnp.float32)   # (E,)

    keep_rate = 0.7
    out_idxs, out_vals, keep_mask = sp_adj_edge_drop(idxs, vals, keep_rate, seed=42)
    jax.block_until_ready((out_idxs, out_vals, keep_mask))

    # Kept edges untouched, dropped edges zeroed.
    m = keep_mask.astype(jnp.bool_)
    assert bool(jnp.all(jnp.where(m, out_vals == vals, out_vals == 0.0)))

    # Empirical keep fraction in the right ballpark.
    frac = float(jnp.mean(keep_mask.astype(jnp.float32)))
    assert 0.5 < frac < 0.9, f"unexpected keep fraction {frac}"

    # Determinism: same seed -> same mask; different seed -> different mask.
    _, _, keep_mask2 = sp_adj_edge_drop(idxs, vals, keep_rate, seed=42)
    assert bool(jnp.all(keep_mask == keep_mask2))
    _, _, keep_mask3 = sp_adj_edge_drop(idxs, vals, keep_rate, seed=7)
    assert not bool(jnp.all(keep_mask == keep_mask3))

    # Padded-slab hot path: tail lanes masked inside the kernel (single block).
    e_pad = SUBLANES * LANE
    vals_2d = jnp.pad(vals, (0, e_pad - num_edges)).reshape(SUBLANES, LANE)
    nv2d, m2d = sp_adj_edge_drop_padded(vals_2d, num_edges, keep_rate, seed=42)
    jax.block_until_ready((nv2d, m2d))
    assert bool(jnp.all(m2d.reshape(-1)[num_edges:] == 0))
    assert bool(jnp.all(nv2d.reshape(-1)[num_edges:] == 0.0))
    # Tiling-invariant RNG: same decisions as the 1-D path for valid lanes.
    assert bool(jnp.all(m2d.reshape(-1)[:num_edges] == keep_mask))

    # Padded slab whose valid region ends inside an interior block
    # (rows=40 -> two blocks): every lane past num_edges must still be masked.
    tall = jnp.pad(vals, (0, 40 * LANE - num_edges)).reshape(40, LANE)
    nv_t, m_t = sp_adj_edge_drop_padded(tall, num_edges, keep_rate, seed=42)
    jax.block_until_ready((nv_t, m_t))
    assert bool(jnp.all(m_t.reshape(-1)[num_edges:] == 0))
    assert bool(jnp.all(nv_t.reshape(-1)[num_edges:] == 0.0))
    assert bool(jnp.all(m_t.reshape(-1)[:num_edges] == keep_mask))

    # Multi-block path exercising the BLOCK_ROWS cap and a ragged final block.
    e_big = 2 * BLOCK_ROWS * LANE + 51_717   # rows = 2150 -> blocks of 1024/1024/102
    vals_big = jax.random.uniform(jax.random.PRNGKey(1), (e_big,), jnp.float32)
    idxs_big = jnp.zeros((2, e_big), dtype=jnp.int32)
    _, nv_big, m_big = sp_adj_edge_drop(idxs_big, vals_big, keep_rate, seed=3)
    jax.block_until_ready((nv_big, m_big))
    mb = m_big.astype(jnp.bool_)
    assert bool(jnp.all(jnp.where(mb, nv_big == vals_big, nv_big == 0.0)))
    frac_big = float(jnp.mean(m_big.astype(jnp.float32)))
    assert 0.6 < frac_big < 0.8, f"unexpected keep fraction {frac_big}"

    # keep_rate == 1.0 fast path returns values unchanged.
    _, v_same, m_same = sp_adj_edge_drop(idxs, vals, 1.0)
    assert bool(jnp.all(v_same == vals)) and bool(jnp.all(m_same == 1))

    print("KERNEL_OK")
</pallas_src>

<mosaic_0001>
module attributes {stable_mosaic.version = 11 : i64} {
  func.func @_edge_drop_kernel(%arg0: i32, %arg1: memref<2xi32, #tpu.memory_space<smem>>, %arg2: memref<2x512xi32, #tpu.memory_space<vmem>>, %arg3: memref<2x512xf32, #tpu.memory_space<vmem>>, %arg4: memref<2x512xf32, #tpu.memory_space<vmem>>, %arg5: memref<2x512xi8, #tpu.memory_space<vmem>>) attributes {dimension_semantics = [#tpu.dimension_semantics<parallel>], iteration_bounds = array<i64: 1>, scalar_prefetch = 1 : i64, scratch_operands = 0 : i64, tpu.core_type = #tpu.core_type<tc>, window_params = [{pipeline_mode = #tpu.pipeline_mode<synchronous>, transform_indices = @transform_0, window_bounds = array<i64: 2, 512>}, {transform_indices = @transform_1, window_bounds = array<i64: 2, 512>}, {transform_indices = @transform_2, window_bounds = array<i64: 2, 512>}, {transform_indices = @transform_3, window_bounds = array<i64: 2, 512>}]} {
    %c0 = arith.constant 0 : index
    %0 = memref.load %arg1[%c0] : memref<2xi32, #tpu.memory_space<smem>>
    %c1 = arith.constant 1 : index
    %1 = memref.load %arg1[%c1] : memref<2xi32, #tpu.memory_space<smem>>
    %c1024_i32 = arith.constant 1024 : i32
    %2 = arith.muli %arg0, %c1024_i32 : i32
    %c-1640531535_i32 = arith.constant -1640531535 : i32
    %3 = arith.muli %2, %c-1640531535_i32 : i32
    %c0_0 = arith.constant 0 : index
    %c0_1 = arith.constant 0 : index
    %4 = vector.load %arg2[%c0_0, %c0_1] : memref<2x512xi32, #tpu.memory_space<vmem>>, vector<2x512xi32>
    %5 = vector.broadcast %3 : i32 to vector<2x512xi32>
    %6 = arith.addi %4, %5 : vector<2x512xi32>
    %7 = vector.broadcast %0 : i32 to vector<2x512xi32>
    %8 = arith.xori %6, %7 : vector<2x512xi32>
    %c16_i32 = arith.constant 16 : i32
    %9 = vector.broadcast %c16_i32 : i32 to vector<2x512xi32>
    %10 = arith.shrui %8, %9 : vector<2x512xi32>
    %11 = arith.xori %8, %10 : vector<2x512xi32>
    %c-2048144789_i32 = arith.constant -2048144789 : i32
    %12 = vector.broadcast %c-2048144789_i32 : i32 to vector<2x512xi32>
    %13 = arith.muli %11, %12 : vector<2x512xi32>
    %c13_i32 = arith.constant 13 : i32
    %14 = vector.broadcast %c13_i32 : i32 to vector<2x512xi32>
    %15 = arith.shrui %13, %14 : vector<2x512xi32>
    %16 = arith.xori %13, %15 : vector<2x512xi32>
    %c-1028477387_i32 = arith.constant -1028477387 : i32
    %17 = vector.broadcast %c-1028477387_i32 : i32 to vector<2x512xi32>
    %18 = arith.muli %16, %17 : vector<2x512xi32>
    %c16_i32_2 = arith.constant 16 : i32
    %19 = vector.broadcast %c16_i32_2 : i32 to vector<2x512xi32>
    %20 = arith.shrui %18, %19 : vector<2x512xi32>
    %21 = arith.xori %18, %20 : vector<2x512xi32>
    %c8_i32 = arith.constant 8 : i32
    %22 = vector.broadcast %c8_i32 : i32 to vector<2x512xi32>
    %23 = arith.shrui %21, %22 : vector<2x512xi32>
    %c11744051_i32 = arith.constant 11744051 : i32
    %24 = vector.broadcast %c11744051_i32 : i32 to vector<2x512xi32>
    %25 = arith.cmpi slt, %23, %24 : vector<2x512xi32>
    %26 = arith.subi %1, %2 : i32
    %c1024_i32_3 = arith.constant 1024 : i32
    %27 = arith.cmpi slt, %26, %c1024_i32_3 : i32
    %28 = arith.extui %27 : i1 to i32
    %c0_i32 = arith.constant 0 : i32
    %29 = arith.cmpi ne, %28, %c0_i32 : i32
    scf.if %29 {
      %33 = tpu.iota {dimensions = array<i32: 0>} : vector<2x512xi32>
      %34 = tpu.iota {dimensions = array<i32: 1>} : vector<2x512xi32>
      %c512_i32 = arith.constant 512 : i32
      %35 = vector.broadcast %c512_i32 : i32 to vector<2x512xi32>
      %36 = arith.muli %33, %35 : vector<2x512xi32>
      %37 = arith.addi %36, %34 : vector<2x512xi32>
      %38 = arith.subi %1, %2 : i32
      %39 = vector.broadcast %38 : i32 to vector<2x512xi32>
      %40 = arith.cmpi slt, %37, %39 : vector<2x512xi32>
      %41 = arith.andi %25, %40 : vector<2x512xi1>
      %42 = arith.extui %41 : vector<2x512xi1> to vector<2x512xi8>
      %c0_5 = arith.constant 0 : index
      %c0_6 = arith.constant 0 : index
      %43 = vector.load %arg5[%c0_5, %c0_6] : memref<2x512xi8, #tpu.memory_space<vmem>>, vector<2x512xi8>
      tpu.vector_store %arg5[%c0_5, %c0_6], %42 {strides = array<i32>} : memref<2x512xi8, #tpu.memory_space<vmem>>, vector<2x512xi8>,
      %c0_7 = arith.constant 0 : index
      %c0_8 = arith.constant 0 : index
      %44 = vector.load %arg3[%c0_7, %c0_8] : memref<2x512xf32, #tpu.memory_space<vmem>>, vector<2x512xf32>
      %cst = arith.constant 0.000000e+00 : f32
      %45 = vector.broadcast %cst : f32 to vector<2x512xf32>
      %46 = arith.select %41, %44, %45 : vector<2x512xi1>, vector<2x512xf32>
      %c0_9 = arith.constant 0 : index
      %c0_10 = arith.constant 0 : index
      %47 = vector.load %arg4[%c0_9, %c0_10] : memref<2x512xf32, #tpu.memory_space<vmem>>, vector<2x512xf32>
      tpu.vector_store %arg4[%c0_9, %c0_10], %46 {strides = array<i32>} : memref<2x512xf32, #tpu.memory_space<vmem>>, vector<2x512xf32>,
    } else {
    }
    %true = arith.constant true
    %30 = arith.xori %27, %true : i1
    %31 = arith.extui %30 : i1 to i32
    %c0_i32_4 = arith.constant 0 : i32
    %32 = arith.cmpi ne, %31, %c0_i32_4 : i32
    scf.if %32 {
      %33 = arith.extui %25 : vector<2x512xi1> to vector<2x512xi8>
      %c0_5 = arith.constant 0 : index
      %c0_6 = arith.constant 0 : index
      %34 = vector.load %arg5[%c0_5, %c0_6] : memref<2x512xi8, #tpu.memory_space<vmem>>, vector<2x512xi8>
      tpu.vector_store %arg5[%c0_5, %c0_6], %33 {strides = array<i32>} : memref<2x512xi8, #tpu.memory_space<vmem>>, vector<2x512xi8>,
      %c0_7 = arith.constant 0 : index
      %c0_8 = arith.constant 0 : index
      %35 = vector.load %arg3[%c0_7, %c0_8] : memref<2x512xf32, #tpu.memory_space<vmem>>, vector<2x512xf32>
      %cst = arith.constant 0.000000e+00 : f32
      %36 = vector.broadcast %cst : f32 to vector<2x512xf32>
      %37 = arith.select %25, %35, %36 : vector<2x512xi1>, vector<2x512xf32>
      %c0_9 = arith.constant 0 : index
      %c0_10 = arith.constant 0 : index
      %38 = vector.load %arg4[%c0_9, %c0_10] : memref<2x512xf32, #tpu.memory_space<vmem>>, vector<2x512xf32>
      tpu.vector_store %arg4[%c0_9, %c0_10], %37 {strides = array<i32>} : memref<2x512xf32, #tpu.memory_space<vmem>>, vector<2x512xf32>,
    } else {
    }
    return
  }
  func.func @transform_0(%arg0: i32, %arg1: memref<2xi32, #tpu.memory_space<smem>>) -> (i32, i32) {
    %c0_i32 = arith.constant 0 : i32
    %c0_i32_0 = arith.constant 0 : i32
    %c0_i32_1 = arith.constant 0 : i32
    return %c0_i32, %c0_i32_0 : i32, i32
  }
  func.func @transform_1(%arg0: i32, %arg1: memref<2xi32, #tpu.memory_space<smem>>) -> (i32, i32) {
    %c0_i32 = arith.constant 0 : i32
    %c0_i32_0 = arith.constant 0 : i32
    return %arg0, %c0_i32 : i32, i32
  }
  func.func @transform_2(%arg0: i32, %arg1: memref<2xi32, #tpu.memory_space<smem>>) -> (i32, i32) {
    %c0_i32 = arith.constant 0 : i32
    %c0_i32_0 = arith.constant 0 : i32
    return %arg0, %c0_i32 : i32, i32
  }
  func.func @transform_3(%arg0: i32, %arg1: memref<2xi32, #tpu.memory_space<smem>>) -> (i32, i32) {
    %c0_i32 = arith.constant 0 : i32
    %c0_i32_0 = arith.constant 0 : i32
    return %arg0, %c0_i32 : i32, i32
  }
}

</mosaic_0001>

<llo_original>
// kernel: _edge_drop_call.1
$region0: #{_edge_drop_call.1}
  #allocation0 [shape = 'u32[]', space=smem, size = 0x4, offset = 0x4, fixed_abs, tag = 'smem constant byte address 0x4 - core index']
  #allocation1 [shape = 'u32[144,128]{1,0:T(1,128)}', space=vmem, size = 0x12000, scoped, tag = 'internal scratch']
  #allocation2 [shape = 's32[1]{0}', space=sflag, size = 0x4, scoped, tag = 'scoped memory for _edge_drop_call.1']
  #allocation3 [shape = 'u8[512]{0}', space=smem, size = 0x200, scoped, tag = 'prefetched SMEM operand 0']
  %s0 = inlined_call_operand.vmem [shape: s32[2], index: 0, kind: input, shape index: {}]
  %s1 = inlined_call_operand.vmem [shape: u32[2,512], index: 1, kind: input, shape index: {}]
  %s2 = inlined_call_operand.vmem [shape: f32[2,512], index: 2, kind: input, shape index: {}]
  %s3 = inlined_call_operand.hbm [shape: f32[2,512], index: 3, kind: output, shape index: {0}]
  %s4 = inlined_call_operand.hbm [shape: s8[2,512], index: 4, kind: output, shape index: {1}]
  %5 = xla_tuple %s3, %s4
  %s6 = sld [smem:[#allocation0]]
  $region34: #{_edge_drop_call.1} parent=0
    _
  %s8 = ssub.s32 1, %s6
  %s9 = scalar_select 0, %s8, %s6
  %s10 = sshll.u32 %s0, 4
  %s11 = int_to_ptr.vmem [resolvable:$true] %s10
  %13 = dma.vmem_to_smem %s11, 16, [#allocation3], [#allocation2]
  %14 = dma.done [#allocation2], 16
  %15 = sfence
  $region1: #{_edge_drop_call.1} parent=0
    #allocation4 [shape = 'u8[4096]{0}', space=vmem, size = 0x1000, scoped, tag = 'output window, operand 0, single buffered']
    #allocation5 [shape = 's32[1]{0}', space=sflag, size = 0x4, scoped, tag = 'scoped memory for _edge_drop_call.1']
    #allocation6 [shape = 'u8[2048]{0}', space=vmem, size = 0x800, scoped, tag = 'output window, operand 1, single buffered']
    #allocation7 [shape = 's32[1]{0}', space=sflag, size = 0x4, scoped, tag = 'scoped memory for _edge_drop_call.1']
    %16 = vsyncpa [#allocation5], 0
    %17 = vsyncpa [#allocation7], 0
    // Predicated region
    $region2: #{_edge_drop_call.1} parent=1 // pred_check
      _
    $region3: #{_edge_drop_call.1} parent=1 // pred_check_branch
      %19 = sbr.rel (0) target = $region5
    $region4: #{_edge_drop_call.1} parent=1 // pred_region
      _
    $region5: #{_edge_drop_call.1} parent=1 // pred_fallthru
      _
    // Predicated region
    $region6: #{_edge_drop_call.1} parent=1 // pred_check
      _
    $region7: #{_edge_drop_call.1} parent=1 // pred_check_branch
      %21 = sbr.rel (0) target = $region9
    $region8: #{_edge_drop_call.1} parent=1 // pred_region
      _
    $region9: #{_edge_drop_call.1} parent=1 // pred_fallthru
      _
    %s24 = sld [smem:[#allocation3]]
    %s25 = sld [smem:[#allocation3 + $0x1]]
    %s26 = smul.u32 0, 1024
    %s27 = smul.u32 0, 3722888192
    %v28 = vld [vmem:[%s1] sm:$0xff]
    %v29 = vstv %s27
    %v30 = vadd.s32 %v28, %v29
    %v31 = vstv %s24
    %v32 = vxor.u32 %v30, %v31
    %v33 = vshrl.u32 %v32, 16
    %v34 = vxor.u32 %v32, %v33
    %v35 = vmul.u32 %v34, 2246822507
    %v36 = vshrl.u32 %v35, 13
    %v37 = vxor.u32 %v35, %v36
    %v38 = vmul.u32 %v37, 3266489909
    %v39 = vshrl.u32 %v38, 16
    %v40 = vxor.u32 %v38, %v39
    %v41 = vshrl.u32 %v40, 8
    %vm42 = vcmp.lt.s32.totalorder %v41, 11744051
    %s43 = ssub.s32 %s25, %s26
    %p44 = scmp.lt.s32.totalorder %s43, 1024
    // Predicated region
    $region10: #{_edge_drop_call.1} parent=1 // pred_check
      %p45 = pneg %p44
    $region11: #{_edge_drop_call.1} parent=1 // pred_check_branch
      %47 = sbr.rel (%p45) target = $region13
    $region12: #{_edge_drop_call.1} parent=1 // pred_region
      %v48 = vlaneseq
      %v49 = vshrl.u32 %v48, 7
      %v50 = vlaneseq
      %v51 = vand.u32 %v50, 127
      %v52 = vadd.s32 %v51, 128
      %v53 = vadd.s32 %v51, 256
      %v54 = vadd.s32 %v51, 384
      %v55 = vmul.u32 %v49, 512
      %v56 = vadd.s32 %v55, %v51
      %v57 = vadd.s32 %v55, %v52
      %v58 = vadd.s32 %v55, %v53
      %v59 = vadd.s32 %v55, %v54
      %v60 = vstv %s43
      %vm61 = vcmp.lt.s32.totalorder %v56, %v60
      %vm62 = vcmp.lt.s32.totalorder %v57, %v60
      %vm63 = vcmp.lt.s32.totalorder %v58, %v60
      %vm64 = vcmp.lt.s32.totalorder %v59, %v60
      %v65 = vsel %vm61, 1, 0
      %v66 = vsel %vm62, 1, 0
      %v67 = vsel %vm63, 1, 0
      %v68 = vsel %vm64, 1, 0
      %v69 = vcombine.low %v65, %v66
      %v70 = vcombine.low %v67, %v68
      %v72 = vunpack.c.l.s4 1983009808
      %v73 = vunpack.c.0.s8 %v72
      %v74 = vlaneseq
      %v75 = vshrl.u32 %v74, 7
      %v76 = vsub.s32 %v73, %v75
      %v77 = vrot.slane %v69, %v76
      %v79 = vunpack.c.l.s4 1983009808
      %v80 = vunpack.c.0.s8 %v79
      %v81 = vlaneseq
      %v82 = vshrl.u32 %v81, 7
      %v83 = vsub.s32 %v80, %v82
      %v84 = vrot.slane %v70, %v83
      %v85 = vcombine.low %v77, %v84
      %vm86 = vcmp.ne.s32.totalorder %v85, 0
      %vm87 = vmand %vm42, %vm86
      %v88 = vsel %vm87, 1, 0
      %v89 = vcombine.high %v88, %v88
      %v91 = vunpack.c.l.s4 1983009808
      %v92 = vunpack.c.0.s8 %v91
      %v93 = vlaneseq
      %v94 = vshrl.u32 %v93, 7
      %v95 = vsub.s32 %v92, %v94
      %v96 = vrot.slane %v88, %v95
      %v98 = vunpack.c.l.s4 1983009808
      %v99 = vunpack.c.0.s8 %v98
      %v100 = vlaneseq
      %v101 = vshrl.u32 %v100, 7
      %v102 = vsub.s32 %v99, %v101
      %v103 = vrot.slane %v89, %v102
      %vm104 = vcmp.ne.s32.totalorder %v96, 0
      %vm105 = vcmp.ne.s32.totalorder %v103, 0
      %v106 = vsel %vm104, 1, 0
      %v107 = vsel %vm105, 1, 0
      %v108 = vpack.c.b16 %v107, %v106
      %v109 = vpack.c.b8 %v108, %v108
      %vm110 = vnez %v109
      %v111 = vsel %vm110, 16843009, 0
      %v113 = vunpack.c.l.s4 1966171168
      %v114 = vunpack.c.0.s8 %v113
      %v115 = vlaneseq
      %v116 = vshrl.u32 %v115, 7
      %v117 = vsub.s32 %v114, %v116
      %v118 = vrot.slane %v111, %v117
      %v119 = vcombine.high %v118, %v118
      %v121 = vunpack.c.l.s4 1966171168
      %v122 = vunpack.c.0.s8 %v121
      %v123 = vlaneseq
      %v124 = vshrl.u32 %v123, 7
      %v125 = vsub.s32 %v122, %v124
      %v126 = vrot.slane %v118, %v125
      %v128 = vunpack.c.l.s4 1966171168
      %v129 = vunpack.c.0.s8 %v128
      %v130 = vlaneseq
      %v131 = vshrl.u32 %v130, 7
      %v132 = vsub.s32 %v129, %v131
      %v133 = vrot.slane %v119, %v132
      %v134 = vcombine.high %v126, %v126
      %v135 = vcombine.high %v133, %v133
      %vm136 = vnez %v126
      %vm137 = vnez %v133
      %vm138 = vnez %v134
      %vm139 = vnez %v135
      %v140 = vsel %vm136, 16843009, 0
      %v141 = vsel %vm137, 16843009, 0
      %v142 = vsel %vm138, 16843009, 0
      %v143 = vsel %vm139, 16843009, 0
      %v144 = vcombine.low %v140, %v141
      %v145 = vcombine.low %v142, %v143
      %v147 = vunpack.c.l.s4 1966171168
      %v148 = vunpack.c.0.s8 %v147
      %v149 = vlaneseq
      %v150 = vshrl.u32 %v149, 7
      %v151 = vsub.s32 %v148, %v150
      %v152 = vrot.slane %v144, %v151
      %v154 = vunpack.c.l.s4 1966171168
      %v155 = vunpack.c.0.s8 %v154
      %v156 = vlaneseq
      %v157 = vshrl.u32 %v156, 7
      %v158 = vsub.s32 %v155, %v157
      %v159 = vrot.slane %v145, %v158
      %v160 = vcombine.low %v152, %v159
      %v162 = vunpack.c.l.s4 1966171168
      %v163 = vunpack.c.0.s8 %v162
      %v164 = vlaneseq
      %v165 = vshrl.u32 %v164, 7
      %v166 = vsub.s32 %v163, %v165
      %v167 = vrot.slane %v160, %v166
      %vm168 = vcmask 1040384
      %vm169 = vsmask.f32 256
      %vm170 = vmand %vm168, %vm169
      %vm171 = vcmask 1041409
      %vm172 = vsmask.f32 1280
      %vm173 = vmand %vm171, %vm172
      %vm174 = vmor %vm173, %vm170
      %vm175 = vcmask 1042434
      %vm176 = vsmask.f32 2304
      %vm177 = vmand %vm175, %vm176
      %vm178 = vmor %vm177, %vm174
      %vm179 = vcmask 1043459
      %vm180 = vsmask.f32 3328
      %vm181 = vmand %vm179, %vm180
      %vm182 = vmor %vm181, %vm178
      %v183 = vld [vmem:[#allocation6] sm:$0xf]
      %v184 = vsel %vm182, %v167, %v183
      %185 = vst [vmem:[#allocation6] sm:$0xf] %v184
      %v186 = vld [vmem:[%s2] sm:$0xff]
      %v187 = vsel %vm87, %v186, 0.0
      %188 = vst [vmem:[#allocation4] sm:$0xff] %v187
    $region13: #{_edge_drop_call.1} parent=1 // pred_fallthru
      _
    %p189 = scmp.ge.s32.totalorder %s43, 1024
    // Predicated region
    $region14: #{_edge_drop_call.1} parent=1 // pred_check
      %p190 = pneg %p189
    $region15: #{_edge_drop_call.1} parent=1 // pred_check_branch
      %192 = sbr.rel (%p190) target = $region17
    $region16: #{_edge_drop_call.1} parent=1 // pred_region
      %v193 = vsel %vm42, 1, 0
      %v194 = vcombine.high %v193, %v193
      %v196 = vunpack.c.l.s4 1983009808
      %v197 = vunpack.c.0.s8 %v196
      %v198 = vlaneseq
      %v199 = vshrl.u32 %v198, 7
      %v200 = vsub.s32 %v197, %v199
      %v201 = vrot.slane %v193, %v200
      %v203 = vunpack.c.l.s4 1983009808
      %v204 = vunpack.c.0.s8 %v203
      %v205 = vlaneseq
      %v206 = vshrl.u32 %v205, 7
      %v207 = vsub.s32 %v204, %v206
      %v208 = vrot.slane %v194, %v207
      %vm209 = vcmp.ne.s32.totalorder %v201, 0
      %vm210 = vcmp.ne.s32.totalorder %v208, 0
      %v211 = vsel %vm209, 1, 0
      %v212 = vsel %vm210, 1, 0
      %v213 = vpack.c.b16 %v212, %v211
      %v214 = vpack.c.b8 %v213, %v213
      %vm215 = vnez %v214
      %v216 = vsel %vm215, 16843009, 0
      %v218 = vunpack.c.l.s4 1966171168
      %v219 = vunpack.c.0.s8 %v218
      %v220 = vlaneseq
      %v221 = vshrl.u32 %v220, 7
      %v222 = vsub.s32 %v219, %v221
      %v223 = vrot.slane %v216, %v222
      %v224 = vcombine.high %v223, %v223
      %v226 = vunpack.c.l.s4 1966171168
      %v227 = vunpack.c.0.s8 %v226
      %v228 = vlaneseq
      %v229 = vshrl.u32 %v228, 7
      %v230 = vsub.s32 %v227, %v229
      %v231 = vrot.slane %v223, %v230
      %v233 = vunpack.c.l.s4 1966171168
      %v234 = vunpack.c.0.s8 %v233
      %v235 = vlaneseq
      %v236 = vshrl.u32 %v235, 7
      %v237 = vsub.s32 %v234, %v236
      %v238 = vrot.slane %v224, %v237
      %v239 = vcombine.high %v231, %v231
      %v240 = vcombine.high %v238, %v238
      %vm241 = vnez %v231
      %vm242 = vnez %v238
      %vm243 = vnez %v239
      %vm244 = vnez %v240
      %v245 = vsel %vm241, 16843009, 0
      %v246 = vsel %vm242, 16843009, 0
      %v247 = vsel %vm243, 16843009, 0
      %v248 = vsel %vm244, 16843009, 0
      %v249 = vcombine.low %v245, %v246
      %v250 = vcombine.low %v247, %v248
      %v252 = vunpack.c.l.s4 1966171168
      %v253 = vunpack.c.0.s8 %v252
      %v254 = vlaneseq
      %v255 = vshrl.u32 %v254, 7
      %v256 = vsub.s32 %v253, %v255
      %v257 = vrot.slane %v249, %v256
      %v259 = vunpack.c.l.s4 1966171168
      %v260 = vunpack.c.0.s8 %v259
      %v261 = vlaneseq
      %v262 = vshrl.u32 %v261, 7
      %v263 = vsub.s32 %v260, %v262
      %v264 = vrot.slane %v250, %v263
      %v265 = vcombine.low %v257, %v264
      %v267 = vunpack.c.l.s4 1966171168
      %v268 = vunpack.c.0.s8 %v267
      %v269 = vlaneseq
      %v270 = vshrl.u32 %v269, 7
      %v271 = vsub.s32 %v268, %v270
      %v272 = vrot.slane %v265, %v271
      %vm273 = vcmask 1040384
      %vm274 = vsmask.f32 256
      %vm275 = vmand %vm273, %vm274
      %vm276 = vcmask 1041409
      %vm277 = vsmask.f32 1280
      %vm278 = vmand %vm276, %vm277
      %vm279 = vmor %vm278, %vm275
      %vm280 = vcmask 1042434
      %vm281 = vsmask.f32 2304
      %vm282 = vmand %vm280, %vm281
      %vm283 = vmor %vm282, %vm279
      %vm284 = vcmask 1043459
      %vm285 = vsmask.f32 3328
      %vm286 = vmand %vm284, %vm285
      %vm287 = vmor %vm286, %vm283
      %v288 = vld [vmem:[#allocation6] sm:$0xf]
      %v289 = vsel %vm287, %v272, %v288
      %290 = vst [vmem:[#allocation6] sm:$0xf] %v289
      %v291 = vld [vmem:[%s2] sm:$0xff]
      %v292 = vsel %vm42, %v291, 0.0
      %293 = vst [vmem:[#allocation4] sm:$0xff] %v292
    $region17: #{_edge_drop_call.1} parent=1 // pred_fallthru
      _
    // Predicated region
    $region18: #{_edge_drop_call.1} parent=1 // pred_check
      _
    $region19: #{_edge_drop_call.1} parent=1 // pred_check_branch
      %295 = sbr.rel (0) target = $region21
    $region20: #{_edge_drop_call.1} parent=1 // pred_region
      %s297 = ssub.s32 128, 128
      %298 = vsyncadd [#allocation5], %s297
      %s300 = sshll.u32 [#allocation4], 4
      %s301 = int_to_ptr.vmem [resolvable:$true] %s300
      %303 = dma.vmem_to_hbm [thread:$0]  %s301, 128, %s3, [#allocation5]
    $region21: #{_edge_drop_call.1} parent=1 // pred_fallthru
      _
    // Predicated region
    $region22: #{_edge_drop_call.1} parent=1 // pred_check
      _
    $region23: #{_edge_drop_call.1} parent=1 // pred_check_branch
      %305 = sbr.rel (0) target = $region25
    $region24: #{_edge_drop_call.1} parent=1 // pred_region
      %s307 = ssub.s32 64, 64
      %308 = vsyncadd [#allocation7], %s307
      %s310 = sshll.u32 [#allocation6], 4
      %s311 = int_to_ptr.vmem [resolvable:$true] %s310
      %313 = dma.vmem_to_hbm [thread:$0]  %s311, 64, %s4, [#allocation7]
    $region25: #{_edge_drop_call.1} parent=1 // pred_fallthru
      _
    // Predicated region
    $region26: #{_edge_drop_call.1} parent=1 // pred_check
      _
    $region27: #{_edge_drop_call.1} parent=1 // pred_check_branch
      %315 = sbr.rel (0) target = $region29
    $region28: #{_edge_drop_call.1} parent=1 // pred_region
      %316 = dma.done [#allocation5], 128
    $region29: #{_edge_drop_call.1} parent=1 // pred_fallthru
      _
    // Predicated region
    $region30: #{_edge_drop_call.1} parent=1 // pred_check
      _
    $region31: #{_edge_drop_call.1} parent=1 // pred_check_branch
      %318 = sbr.rel (0) target = $region33
    $region32: #{_edge_drop_call.1} parent=1 // pred_region
      %319 = dma.done [#allocation7], 64
    $region33: #{_edge_drop_call.1} parent=1 // pred_fallthru
      _
    %320 = vsyncpa [#allocation5], 1
    %321 = vsyncpa [#allocation7], 1

</llo_original>
